<compile_context>
chip_gen: v7x
topology: tpu7x:2x2x1
jax: 0.10.0
libtpu: 0.0.40
codegen_flags: <defaults>
</compile_context>

<pallas_src>
import jax
import jax.numpy as jnp
from jax.experimental import pallas as pl
from jax.experimental.pallas import tpu as pltpu


def _copy_kernel(x_ref, o_ref):
    # Pure pass-through of the current VMEM tile.
    o_ref[...] = x_ref[...]


# Lane widths tried for the lane-dense slab (largest first).  Capping at 2048
# lanes bounds a 512-row f32 block at 512*2048*4B = 4 MiB, so double-buffered
# input + output (4 buffers) stays at ~16 MiB: safe on every generation.
_LANE_CANDIDATES = (2048, 1024, 512, 256, 128)
_MAX_BLOCK_ROWS = 512


def basic_t5_forward(x):
    """Pallas pass-through matching BasicT5's (trivial) forward contract.

    x: any shape/dtype -> returns an identical array.
    """
    n = x.size
    lanes = next((c for c in _LANE_CANDIDATES if n % c == 0), None)

    if lanes is None:
        # Odd element count: single full-array block (block == full array dims
        # is always a legal BlockSpec).  Real T5 activation shapes always take
        # the lane-dense path below.
        return pl.pallas_call(
            _copy_kernel,
            out_shape=jax.ShapeDtypeStruct(x.shape, x.dtype),
            input_output_aliases={0: 0},
        )(x)

    # Collapse (batch, seq, hidden, ...) into a lane-dense [rows, lanes] slab.
    rows = n // lanes
    x2 = x.reshape(rows, lanes)

    # Block rows: 512 (multiple of 8) when there are enough rows, otherwise the
    # full row extent (legal because it equals the array dim).
    block_rows = min(rows, _MAX_BLOCK_ROWS)
    grid = (pl.cdiv(rows, block_rows),)

    y2 = pl.pallas_call(
        _copy_kernel,
        out_shape=jax.ShapeDtypeStruct((rows, lanes), x.dtype),
        grid=grid,
        in_specs=[pl.BlockSpec((block_rows, lanes), lambda i: (i, 0))],
        out_specs=pl.BlockSpec((block_rows, lanes), lambda i: (i, 0)),
        input_output_aliases={0: 0},
        compiler_params=pltpu.CompilerParams(
            dimension_semantics=("parallel",),
        ),
    )(x2)
    return y2.reshape(x.shape)


if __name__ == "__main__":
    key = jax.random.PRNGKey(0)
    batch, seq, hidden = 2, 8, 32
    x = jax.random.normal(key, (batch, seq, hidden), dtype=jnp.float32)

    y = jax.jit(basic_t5_forward)(x)
    jax.block_until_ready(y)

    assert y.shape == x.shape and y.dtype == x.dtype
    assert bool(jnp.all(y == x))
    print("KERNEL_OK")
</pallas_src>

<mosaic_0001>
module attributes {stable_mosaic.version = 11 : i64} {
  func.func @_copy_kernel(%arg0: i32, %arg1: memref<1x512xf32, #tpu.memory_space<vmem>>, %arg2: memref<1x512xf32, #tpu.memory_space<vmem>>) attributes {dimension_semantics = [#tpu.dimension_semantics<parallel>], iteration_bounds = array<i64: 1>, scalar_prefetch = 0 : i64, scratch_operands = 0 : i64, tpu.core_type = #tpu.core_type<tc>, window_params = [{transform_indices = @transform_0, window_bounds = array<i64: 1, 512>}, {transform_indices = @transform_1, window_bounds = array<i64: 1, 512>}]} {
    %c0 = arith.constant 0 : index
    %c0_0 = arith.constant 0 : index
    %0 = vector.load %arg1[%c0, %c0_0] : memref<1x512xf32, #tpu.memory_space<vmem>>, vector<1x512xf32>
    %c0_1 = arith.constant 0 : index
    %c0_2 = arith.constant 0 : index
    %1 = vector.load %arg2[%c0_1, %c0_2] : memref<1x512xf32, #tpu.memory_space<vmem>>, vector<1x512xf32>
    tpu.vector_store %arg2[%c0_1, %c0_2], %0 {strides = array<i32>} : memref<1x512xf32, #tpu.memory_space<vmem>>, vector<1x512xf32>,
    return
  }
  func.func @transform_0(%arg0: i32) -> (i32, i32) {
    %c0_i32 = arith.constant 0 : i32
    %c0_i32_0 = arith.constant 0 : i32
    return %arg0, %c0_i32 : i32, i32
  }
  func.func @transform_1(%arg0: i32) -> (i32, i32) {
    %c0_i32 = arith.constant 0 : i32
    %c0_i32_0 = arith.constant 0 : i32
    return %arg0, %c0_i32 : i32, i32
  }
}

</mosaic_0001>

<llo_original>
// kernel: basic_t5_forward.1
$region0: #{basic_t5_forward.1}
  #allocation0 [shape = 'u32[]', space=smem, size = 0x4, offset = 0x4, fixed_abs, tag = 'smem constant byte address 0x4 - core index']
  #allocation1 [shape = 'u32[144,128]{1,0:T(1,128)}', space=vmem, size = 0x12000, scoped, tag = 'internal scratch']
  %s0 = inlined_call_operand.vmem [shape: f32[1,512], index: 0, kind: input, shape index: {}, may-alias: {0,1}]
  %s1 = inlined_call_operand.vmem [shape: f32[1,512], index: 1, kind: output, shape index: {}, may-alias: {0,1}]
  %s2 = sld [smem:[#allocation0]]
  $region14: #{basic_t5_forward.1} parent=0
    _
  %s4 = ssub.s32 1, %s2
  %s5 = scalar_select 0, %s4, %s2
  // Predicated region
  $region2: #{basic_t5_forward.1} parent=0 // pred_check
    _
  $region3: #{basic_t5_forward.1} parent=0 // pred_check_branch
    %7 = sbr.rel (0) target = $region5
  $region4: #{basic_t5_forward.1} parent=0 // pred_region
    _
  $region5: #{basic_t5_forward.1} parent=0 // pred_fallthru
    _
  %v8 = vld [vmem:[%s0] sm:$0xf]
  %v9 = vlaneseq
  %vm10 = vcmp.ge.s32.totalorder %v9, 0
  %vm11 = vcmp.lt.s32.totalorder %v9, 512
  %vm12 = vmand %vm10, %vm11
  %13 = vst.msk [vmem:[%s1] sm:$0xf] %vm12, %v8
  // Predicated region
  $region6: #{basic_t5_forward.1} parent=0 // pred_check
    _
  $region7: #{basic_t5_forward.1} parent=0 // pred_check_branch
    %15 = sbr.rel (0) target = $region9
  $region8: #{basic_t5_forward.1} parent=0 // pred_region
    _
  $region9: #{basic_t5_forward.1} parent=0 // pred_fallthru
    _
  // Predicated region
  $region10: #{basic_t5_forward.1} parent=0 // pred_check
    _
  $region11: #{basic_t5_forward.1} parent=0 // pred_check_branch
    %17 = sbr.rel (0) target = $region13
  $region12: #{basic_t5_forward.1} parent=0 // pred_region
    _
  $region13: #{basic_t5_forward.1} parent=0 // pred_fallthru
    _

</llo_original>
